<compile_context>
chip_gen: v6e
topology: v6e:2x2x1
jax: 0.10.0
libtpu: 0.0.40
codegen_flags: <defaults>
</compile_context>

<pallas_src>
import functools

import jax
import jax.numpy as jnp
from jax.experimental import pallas as pl
from jax.experimental.pallas import tpu as pltpu

BN_EPS = 1e-5


def classification_head_kernel(x_ref, w1_ref, w2_ref, w3_ref, b_ref, out_ref,
                               *, h0p, h1p, lp):
    # Cast activations to the weights' compute dtype (bf16 fast path or f32);
    # accumulation and the bias/ReLU epilogue stay f32.
    x = x_ref[...].astype(w1_ref.dtype)

    # Static, 128-aligned slices of the concatenated bias row (all f32).
    b1 = b_ref[:, 0:h0p]
    b2 = b_ref[:, h0p:h0p + h1p]
    b3 = b_ref[:, h0p + h1p:h0p + h1p + lp]

    # dense (+ folded norm / norm_1); dropout is identity in eval mode
    h = jnp.dot(x, w1_ref[...], preferred_element_type=jnp.float32) + b1
    h = jnp.maximum(h, 0.0).astype(w2_ref.dtype)

    # dense_1 (+ folded norm_2)
    h = jnp.dot(h, w2_ref[...], preferred_element_type=jnp.float32) + b2
    h = jnp.maximum(h, 0.0).astype(w3_ref.dtype)

    # out_proj
    out = jnp.dot(h, w3_ref[...], preferred_element_type=jnp.float32) + b3
    out_ref[...] = out.astype(out_ref.dtype)


def _round_up(x, m):
    return (x + m - 1) // m * m


def _pad_2d(a, rows, cols):
    pr, pc = rows - a.shape[0], cols - a.shape[1]
    if pr == 0 and pc == 0:
        return a
    return jnp.pad(a, ((0, pr), (0, pc)))


def _fold_bn_into_linears(p):
    """Fold eval-mode BatchNorms into the adjacent Linear weights/biases.

    norm  : folded into the *input* side of dense.
    norm_1: folded into the *output* side of dense (ReLU comes after BN).
    norm_2: folded into the *output* side of dense_1.
    """
    s0 = p["g0"] * jax.lax.rsqrt(p["v0"] + BN_EPS)   # [1, F0]
    t0 = p["b0"] - p["m0"] * s0
    s1 = p["g1"] * jax.lax.rsqrt(p["v1"] + BN_EPS)   # [1, H0]
    t1 = p["b1"] - p["m1"] * s1
    s2 = p["g2"] * jax.lax.rsqrt(p["v2"] + BN_EPS)   # [1, H1]
    t2 = p["b2"] - p["m2"] * s2

    # dense: rows scaled by s0 (input BN), columns scaled by s1 (output BN)
    w1f = (s0.T * p["w1"]) * s1
    b1f = (t0 @ p["w1"] + p["bb1"]) * s1 + t1
    # dense_1: columns scaled by s2 (output BN)
    w2f = p["w2"] * s2
    b2f = p["bb2"] * s2 + t2
    return w1f, b1f, w2f, b2f, p["w3"], p["bb3"]


def _pick_batch_tile(B, batch_tile):
    if B <= 256:
        return B                       # single full block
    # >= 2 grid steps (so v7x's second TC gets work); tiles are multiples of
    # 256 (MXU M-tile on v6e/v7x, also a multiple of 128 for v5e), capped.
    half = _round_up(pl.cdiv(B, 2), 256)
    return min(max(batch_tile, 256), half)


@functools.partial(jax.jit, static_argnames=("batch_tile", "compute_dtype"))
def classification_head(features, params, *, batch_tile=1024,
                        compute_dtype=jnp.bfloat16):
    # BN folding in f32 (then optionally cast weights for the MXU).
    w1f, b1f, w2f, b2f, w3, b3 = _fold_bn_into_linears(params)

    B, F0 = features.shape
    H0, H1, L = w1f.shape[1], w2f.shape[1], w3.shape[1]
    H0p, H1p, Lp = _round_up(H0, 128), _round_up(H1, 128), _round_up(L, 128)

    # Zero-pad hidden/output lanes to multiples of 128 -> lane-dense
    # activations and unmasked output stores. Weights are tiny (~KBs).
    w1p = _pad_2d(w1f, F0, H0p)
    w2p = _pad_2d(w2f, H0p, H1p)
    w3p = _pad_2d(w3, H1p, Lp)
    bias = jnp.concatenate(
        [_pad_2d(b1f, 1, H0p), _pad_2d(b2f, 1, H1p), _pad_2d(b3, 1, Lp)],
        axis=1)                                       # [1, H0p+H1p+Lp], f32

    if compute_dtype != jnp.float32:
        w1p = w1p.astype(compute_dtype)
        w2p = w2p.astype(compute_dtype)
        w3p = w3p.astype(compute_dtype)
    # x is cast in-kernel (no extra HBM pass over the big operand).

    tb = _pick_batch_tile(B, batch_tile)
    grid = (pl.cdiv(B, tb),)           # ragged last block handled by Pallas

    kernel = functools.partial(
        classification_head_kernel, h0p=H0p, h1p=H1p, lp=Lp)

    out = pl.pallas_call(
        kernel,
        out_shape=jax.ShapeDtypeStruct((B, Lp), jnp.float32),
        grid=grid,
        in_specs=[
            pl.BlockSpec((tb, F0), lambda i: (i, 0)),          # x tile
            pl.BlockSpec((F0, H0p), lambda i: (0, 0)),         # W1 (resident)
            pl.BlockSpec((H0p, H1p), lambda i: (0, 0)),        # W2 (resident)
            pl.BlockSpec((H1p, Lp), lambda i: (0, 0)),         # W3 (resident)
            pl.BlockSpec((1, H0p + H1p + Lp), lambda i: (0, 0)),  # biases
        ],
        out_specs=pl.BlockSpec((tb, Lp), lambda i: (i, 0)),
        compiler_params=pltpu.CompilerParams(
            dimension_semantics=("parallel",)),
    )(features, w1p, w2p, w3p, bias)

    return out[:, :L]


def init_params(key, out_size, hidden0, hidden1, num_label):
    ks = jax.random.split(key, 18)

    def linear(kw, kb, fan_in, fan_out):
        # PyTorch default Linear init: U(-1/sqrt(fan_in), 1/sqrt(fan_in))
        bound = 1.0 / jnp.sqrt(fan_in)
        w = jax.random.uniform(kw, (fan_in, fan_out), jnp.float32, -bound, bound)
        b = jax.random.uniform(kb, (1, fan_out), jnp.float32, -bound, bound)
        return w, b

    w1, bb1 = linear(ks[0], ks[1], out_size, hidden0)
    w2, bb2 = linear(ks[2], ks[3], hidden0, hidden1)
    w3, bb3 = linear(ks[4], ks[5], hidden1, num_label)

    def bn(f, k0, k1, k2, k3):
        # non-trivial stats so the BN-folding is actually exercised
        gamma = jax.random.uniform(k0, (1, f), jnp.float32, 0.5, 1.5)
        beta = 0.1 * jax.random.normal(k1, (1, f), jnp.float32)
        mean = 0.1 * jax.random.normal(k2, (1, f), jnp.float32)
        var = jax.random.uniform(k3, (1, f), jnp.float32, 0.5, 1.5)
        return gamma, beta, mean, var

    g0, b0, m0, v0 = bn(out_size, *ks[6:10])
    g1, b1, m1, v1 = bn(hidden0, *ks[10:14])
    g2, b2, m2, v2 = bn(hidden1, *ks[14:18])

    return dict(
        g0=g0, b0=b0, m0=m0, v0=v0,
        w1=w1, bb1=bb1,
        g1=g1, b1=b1, m1=m1, v1=v1,
        w2=w2, bb2=bb2,
        g2=g2, b2=b2, m2=m2, v2=v2,
        w3=w3, bb3=bb3,
    )


def _bn_ref(x, gamma, beta, mean, var):
    return (x - mean) * jax.lax.rsqrt(var + BN_EPS) * gamma + beta


def reference(features, p):
    x = _bn_ref(features, p["g0"], p["b0"], p["m0"], p["v0"])
    x = x @ p["w1"] + p["bb1"]
    x = jnp.maximum(_bn_ref(x, p["g1"], p["b1"], p["m1"], p["v1"]), 0.0)
    x = x @ p["w2"] + p["bb2"]
    x = jnp.maximum(_bn_ref(x, p["g2"], p["b2"], p["m2"], p["v2"]), 0.0)
    return x @ p["w3"] + p["bb3"]


if __name__ == "__main__":
    # args.out_size=32, args.linear_layer_size=[64, 32], args.num_label=4
    OUT_SIZE, H0, H1, NUM_LABEL = 32, 64, 32, 4

    key = jax.random.PRNGKey(0)
    k_feat1, k_feat2, k_params = jax.random.split(key, 3)
    params = init_params(k_params, OUT_SIZE, H0, H1, NUM_LABEL)

    # TODO(synk): training-mode BatchNorm (batch statistics) and Dropout masks
    # are not implemented; this kernel reproduces eval-mode forward semantics.

    # Case 1: tiny batch, exact f32 path (single grid step).
    B1 = 8
    feats1 = jax.random.normal(k_feat1, (B1, OUT_SIZE), jnp.float32)
    out1 = classification_head(feats1, params, compute_dtype=jnp.float32)
    jax.block_until_ready(out1)
    ref1 = reference(feats1, params)
    assert out1.shape == (B1, NUM_LABEL)
    assert jnp.allclose(out1, ref1, atol=1e-4, rtol=1e-4), (
        float(jnp.max(jnp.abs(out1 - ref1))))

    # Case 2: exercises the ragged cdiv grid (2 parallel steps, tb=256) and
    # the default bf16-MXU fast path (f32 accumulation).
    B2 = 300
    feats2 = jax.random.normal(k_feat2, (B2, OUT_SIZE), jnp.float32)
    out2 = classification_head(feats2, params)
    jax.block_until_ready(out2)
    ref2 = reference(feats2, params)
    assert out2.shape == (B2, NUM_LABEL)
    err = float(jnp.max(jnp.abs(out2 - ref2)))
    assert err < 5e-2, err

    print("KERNEL_OK")
</pallas_src>

<mosaic_0001>
module attributes {stable_mosaic.version = 11 : i64} {
  func.func @classification_head_kernel(%arg0: i32, %arg1: memref<8x32xf32, #tpu.memory_space<vmem>>, %arg2: memref<32x128xf32, #tpu.memory_space<vmem>>, %arg3: memref<128x128xf32, #tpu.memory_space<vmem>>, %arg4: memref<128x128xf32, #tpu.memory_space<vmem>>, %arg5: memref<1x384xf32, #tpu.memory_space<vmem>>, %arg6: memref<8x128xf32, #tpu.memory_space<vmem>>) attributes {dimension_semantics = [#tpu.dimension_semantics<parallel>], iteration_bounds = array<i64: 1>, scalar_prefetch = 0 : i64, scratch_operands = 0 : i64, tpu.core_type = #tpu.core_type<tc>, window_params = [{transform_indices = @transform_0, window_bounds = array<i64: 8, 32>}, {pipeline_mode = #tpu.pipeline_mode<synchronous>, transform_indices = @transform_1, window_bounds = array<i64: 32, 128>}, {pipeline_mode = #tpu.pipeline_mode<synchronous>, transform_indices = @transform_2, window_bounds = array<i64: 128, 128>}, {pipeline_mode = #tpu.pipeline_mode<synchronous>, transform_indices = @transform_3, window_bounds = array<i64: 128, 128>}, {pipeline_mode = #tpu.pipeline_mode<synchronous>, transform_indices = @transform_4, window_bounds = array<i64: 1, 384>}, {transform_indices = @transform_5, window_bounds = array<i64: 8, 128>}]} {
    %c0 = arith.constant 0 : index
    %c0_0 = arith.constant 0 : index
    %0 = vector.load %arg1[%c0, %c0_0] : memref<8x32xf32, #tpu.memory_space<vmem>>, vector<8x32xf32>
    %c0_1 = arith.constant 0 : index
    %c0_2 = arith.constant 0 : index
    %1 = vector.load %arg5[%c0_1, %c0_2] : memref<1x384xf32, #tpu.memory_space<vmem>>, vector<1x128xf32>
    %c0_3 = arith.constant 0 : index
    %c128 = arith.constant 128 : index
    %2 = vector.load %arg5[%c0_3, %c128] : memref<1x384xf32, #tpu.memory_space<vmem>>, vector<1x128xf32>
    %c0_4 = arith.constant 0 : index
    %c256 = arith.constant 256 : index
    %3 = vector.load %arg5[%c0_4, %c256] : memref<1x384xf32, #tpu.memory_space<vmem>>, vector<1x128xf32>
    %c0_5 = arith.constant 0 : index
    %c0_6 = arith.constant 0 : index
    %4 = vector.load %arg2[%c0_5, %c0_6] : memref<32x128xf32, #tpu.memory_space<vmem>>, vector<32x128xf32>
    %cst = arith.constant dense<0.000000e+00> : vector<8x128xf32>
    %5 = tpu.matmul %0, %4, %cst {dimension_numbers = #tpu.dot_dimension_numbers<[1], [0], [0], [1], [0, 0, 1, 1], [], []>} : vector<8x32xf32>, vector<32x128xf32>, vector<8x128xf32> -> vector<8x128xf32>
    %6 = vector.broadcast %1 : vector<1x128xf32> to vector<8x128xf32>
    %7 = arith.addf %5, %6 : vector<8x128xf32>
    %cst_7 = arith.constant 0.000000e+00 : f32
    %8 = vector.broadcast %cst_7 : f32 to vector<8x128xf32>
    %9 = arith.maximumf %7, %8 : vector<8x128xf32>
    %c0_8 = arith.constant 0 : index
    %c0_9 = arith.constant 0 : index
    %10 = vector.load %arg3[%c0_8, %c0_9] : memref<128x128xf32, #tpu.memory_space<vmem>>, vector<128x128xf32>
    %cst_10 = arith.constant dense<0.000000e+00> : vector<8x128xf32>
    %11 = tpu.matmul %9, %10, %cst_10 {dimension_numbers = #tpu.dot_dimension_numbers<[1], [0], [0], [1], [0, 0, 1, 1], [], []>} : vector<8x128xf32>, vector<128x128xf32>, vector<8x128xf32> -> vector<8x128xf32>
    %12 = vector.broadcast %2 : vector<1x128xf32> to vector<8x128xf32>
    %13 = arith.addf %11, %12 : vector<8x128xf32>
    %cst_11 = arith.constant 0.000000e+00 : f32
    %14 = vector.broadcast %cst_11 : f32 to vector<8x128xf32>
    %15 = arith.maximumf %13, %14 : vector<8x128xf32>
    %c0_12 = arith.constant 0 : index
    %c0_13 = arith.constant 0 : index
    %16 = vector.load %arg4[%c0_12, %c0_13] : memref<128x128xf32, #tpu.memory_space<vmem>>, vector<128x128xf32>
    %cst_14 = arith.constant dense<0.000000e+00> : vector<8x128xf32>
    %17 = tpu.matmul %15, %16, %cst_14 {dimension_numbers = #tpu.dot_dimension_numbers<[1], [0], [0], [1], [0, 0, 1, 1], [], []>} : vector<8x128xf32>, vector<128x128xf32>, vector<8x128xf32> -> vector<8x128xf32>
    %18 = vector.broadcast %3 : vector<1x128xf32> to vector<8x128xf32>
    %19 = arith.addf %17, %18 : vector<8x128xf32>
    %c0_15 = arith.constant 0 : index
    %c0_16 = arith.constant 0 : index
    %20 = vector.load %arg6[%c0_15, %c0_16] : memref<8x128xf32, #tpu.memory_space<vmem>>, vector<8x128xf32>
    tpu.vector_store %arg6[%c0_15, %c0_16], %19 {strides = array<i32>} : memref<8x128xf32, #tpu.memory_space<vmem>>, vector<8x128xf32>,
    return
  }
  func.func @transform_0(%arg0: i32) -> (i32, i32) {
    %c0_i32 = arith.constant 0 : i32
    %c0_i32_0 = arith.constant 0 : i32
    return %arg0, %c0_i32 : i32, i32
  }
  func.func @transform_1(%arg0: i32) -> (i32, i32) {
    %c0_i32 = arith.constant 0 : i32
    %c0_i32_0 = arith.constant 0 : i32
    %c0_i32_1 = arith.constant 0 : i32
    return %c0_i32, %c0_i32_0 : i32, i32
  }
  func.func @transform_2(%arg0: i32) -> (i32, i32) {
    %c0_i32 = arith.constant 0 : i32
    %c0_i32_0 = arith.constant 0 : i32
    %c0_i32_1 = arith.constant 0 : i32
    return %c0_i32, %c0_i32_0 : i32, i32
  }
  func.func @transform_3(%arg0: i32) -> (i32, i32) {
    %c0_i32 = arith.constant 0 : i32
    %c0_i32_0 = arith.constant 0 : i32
    %c0_i32_1 = arith.constant 0 : i32
    return %c0_i32, %c0_i32_0 : i32, i32
  }
  func.func @transform_4(%arg0: i32) -> (i32, i32) {
    %c0_i32 = arith.constant 0 : i32
    %c0_i32_0 = arith.constant 0 : i32
    %c0_i32_1 = arith.constant 0 : i32
    return %c0_i32, %c0_i32_0 : i32, i32
  }
  func.func @transform_5(%arg0: i32) -> (i32, i32) {
    %c0_i32 = arith.constant 0 : i32
    %c0_i32_0 = arith.constant 0 : i32
    return %arg0, %c0_i32 : i32, i32
  }
}

</mosaic_0001>

<llo_original>
// kernel: classification_head.1
$region0: #{classification_head.1}
  #allocation0 [shape = 'u32[]', space=smem, size = 0x4, offset = 0x4, fixed_abs, tag = 'smem constant byte address 0x4 - core index']
  #allocation1 [shape = 'u32[144,128]{1,0:T(1,128)}', space=vmem, size = 0x12000, scoped, tag = 'internal scratch']
  %s0 = inlined_call_operand.vmem [shape: f32[8,32], index: 0, kind: input, shape index: {}]
  %s1 = inlined_call_operand.vmem [shape: f32[32,128], index: 1, kind: input, shape index: {}]
  %s2 = inlined_call_operand.vmem [shape: f32[128,128], index: 2, kind: input, shape index: {}]
  %s3 = inlined_call_operand.vmem [shape: f32[128,128], index: 3, kind: input, shape index: {}]
  %s4 = inlined_call_operand.vmem [shape: f32[1,384], index: 4, kind: input, shape index: {}]
  %s5 = inlined_call_operand.vmem [shape: f32[8,128], index: 5, kind: output, shape index: {}]
  %s6 = sld [smem:[#allocation0]]
  $region30: #{classification_head.1} parent=0
    _
  %s8 = ssub.s32 1, %s6
  %s9 = scalar_select 0, %s8, %s6
  // Predicated region
  $region2: #{classification_head.1} parent=0 // pred_check
    _
  $region3: #{classification_head.1} parent=0 // pred_check_branch
    %11 = sbr.rel (0) target = $region5
  $region4: #{classification_head.1} parent=0 // pred_region
    _
  $region5: #{classification_head.1} parent=0 // pred_fallthru
    _
  // Predicated region
  $region6: #{classification_head.1} parent=0 // pred_check
    _
  $region7: #{classification_head.1} parent=0 // pred_check_branch
    %13 = sbr.rel (0) target = $region9
  $region8: #{classification_head.1} parent=0 // pred_region
    _
  $region9: #{classification_head.1} parent=0 // pred_fallthru
    _
  // Predicated region
  $region10: #{classification_head.1} parent=0 // pred_check
    _
  $region11: #{classification_head.1} parent=0 // pred_check_branch
    %15 = sbr.rel (0) target = $region13
  $region12: #{classification_head.1} parent=0 // pred_region
    _
  $region13: #{classification_head.1} parent=0 // pred_fallthru
    _
  // Predicated region
  $region14: #{classification_head.1} parent=0 // pred_check
    _
  $region15: #{classification_head.1} parent=0 // pred_check_branch
    %17 = sbr.rel (0) target = $region17
  $region16: #{classification_head.1} parent=0 // pred_region
    _
  $region17: #{classification_head.1} parent=0 // pred_fallthru
    _
  // Predicated region
  $region18: #{classification_head.1} parent=0 // pred_check
    _
  $region19: #{classification_head.1} parent=0 // pred_check_branch
    %19 = sbr.rel (0) target = $region21
  $region20: #{classification_head.1} parent=0 // pred_region
    _
  $region21: #{classification_head.1} parent=0 // pred_fallthru
    _
  %v20 = vld [vmem:[%s0] sm:$0xff]
  %v21 = vld [vmem:[%s4] sm:$0x1]
  %v22 = vld [vmem:[%s4 + $0x1] sm:$0x1]
  %v23 = vld [vmem:[%s4 + $0x2] sm:$0x1]
  %v24 = vld [vmem:[%s1] sm:$0xff]
  %v25 = vld [vmem:[%s1 + $0x8] sm:$0xff]
  %v26 = vld [vmem:[%s1 + $0x10] sm:$0xff]
  %v27 = vld [vmem:[%s1 + $0x18] sm:$0xff]
  %v29 = vlaneseq
  %v30 = vshrl.u32 %v29, 7
  %v31 = vsub.s32 0, %v30
  %v32 = vrot.slane %v21, %v31
  %vm34 = vcmask 261120
  %v36 = vsel %vm34, %v20, 0
  %38 = vmatprep.subr.mxu0 0.0
  %39 = vmatpush1.msra.mxu0 0.0
  %40 = vmatprep.subr.mxu0 0.0
  %41 = vmatpush1.msra.mxu0 0.0
  %42 = vmatprep.subr.mxu0 0.0
  %43 = vmatpush1.msra.mxu0 0.0
  %44 = vmatprep.subr.mxu0 0.0
  %45 = vmatpush1.msra.mxu0 0.0
  %46 = vmatprep.subr.mxu0 0.0
  %47 = vmatpush1.msra.mxu0 0.0
  %48 = vmatprep.subr.mxu0 0.0
  %49 = vmatpush1.msra.mxu0 0.0
  %50 = vmatprep.subr.mxu0 0.0
  %51 = vmatpush1.msra.mxu0 0.0
  %52 = vmatprep.subr.mxu0 0.0
  %53 = vmatpush1.msra.mxu0 0.0
  %54 = vmatprep.subr.mxu0 0.0
  %55 = vmatpush1.msra.mxu0 0.0
  %56 = vmatprep.subr.mxu0 0.0
  %57 = vmatpush1.msra.mxu0 0.0
  %58 = vmatprep.subr.mxu0 0.0
  %59 = vmatpush1.msra.mxu0 0.0
  %60 = vmatprep.subr.mxu0 0.0
  %61 = vmatpush1.msra.mxu0 0.0
  %62 = vmatprep.subr.mxu0 0.0
  %63 = vmatpush1.msra.mxu0 %v27
  %64 = vmatprep.subr.mxu0 0.0
  %65 = vmatpush1.msra.mxu0 %v26
  %66 = vmatprep.subr.mxu0 0.0
  %67 = vmatpush1.msra.mxu0 %v25
  %68 = vmatprep.subr.mxu0 0.0
  %69 = vmatpush1.msra.mxu0 %v24
  %70 = vmatprep.subr.mxu0 0.0
  %71 = vmatpush2.msra.mxu0 0.0
  %72 = vmatprep.subr.mxu0 0.0
  %73 = vmatpush2.msra.mxu0 0.0
  %74 = vmatprep.subr.mxu0 0.0
  %75 = vmatpush2.msra.mxu0 0.0
  %76 = vmatprep.subr.mxu0 0.0
  %77 = vmatpush2.msra.mxu0 0.0
  %78 = vmatprep.subr.mxu0 0.0
  %79 = vmatpush2.msra.mxu0 0.0
  %80 = vmatprep.subr.mxu0 0.0
  %81 = vmatpush2.msra.mxu0 0.0
  %82 = vmatprep.subr.mxu0 0.0
  %83 = vmatpush2.msra.mxu0 0.0
  %84 = vmatprep.subr.mxu0 0.0
  %85 = vmatpush2.msra.mxu0 0.0
  %86 = vmatprep.subr.mxu0 0.0
  %87 = vmatpush2.msra.mxu0 0.0
  %88 = vmatprep.subr.mxu0 0.0
  %89 = vmatpush2.msra.mxu0 0.0
  %90 = vmatprep.subr.mxu0 0.0
  %91 = vmatpush2.msra.mxu0 0.0
  %92 = vmatprep.subr.mxu0 0.0
  %93 = vmatpush2.msra.mxu0 0.0
  %94 = vmatprep.subr.mxu0 0.0
  %95 = vmatpush2.msra.mxu0 0.0
  %96 = vmatprep.subr.mxu0 0.0
  %97 = vmatpush2.msra.mxu0 0.0
  %98 = vmatprep.subr.mxu0 0.0
  %99 = vmatpush2.msra.mxu0 0.0
  %100 = vmatprep.subr.mxu0 0.0
  %101 = vmatpush2.msra.mxu0 0.0
  %102 = vmatprep.mubr.f32.mxu0 0.0
  %103 = vmatmul.mubr.f32.gmra.mxu0 %v36
  %v104 = vpop.f32.mrf.mxu0
  %v105 = vadd.f32 %v32, %v104
  %v106 = vpop.f32.mrf.mxu0
  %107 = vdwg.mxu0
  %v108 = vmax.f32 %v105, 0.0
  %v109 = vld [vmem:[%s2] sm:$0xff]
  %v110 = vld [vmem:[%s2 + $0x8] sm:$0xff]
  %v111 = vld [vmem:[%s2 + $0x10] sm:$0xff]
  %v112 = vld [vmem:[%s2 + $0x18] sm:$0xff]
  %v113 = vld [vmem:[%s2 + $0x20] sm:$0xff]
  %v114 = vld [vmem:[%s2 + $0x28] sm:$0xff]
  %v115 = vld [vmem:[%s2 + $0x30] sm:$0xff]
  %v116 = vld [vmem:[%s2 + $0x38] sm:$0xff]
  %v117 = vld [vmem:[%s2 + $0x40] sm:$0xff]
  %v118 = vld [vmem:[%s2 + $0x48] sm:$0xff]
  %v119 = vld [vmem:[%s2 + $0x50] sm:$0xff]
  %v120 = vld [vmem:[%s2 + $0x58] sm:$0xff]
  %v121 = vld [vmem:[%s2 + $0x60] sm:$0xff]
  %v122 = vld [vmem:[%s2 + $0x68] sm:$0xff]
  %v123 = vld [vmem:[%s2 + $0x70] sm:$0xff]
  %v124 = vld [vmem:[%s2 + $0x78] sm:$0xff]
  %v126 = vlaneseq
  %v127 = vshrl.u32 %v126, 7
  %v128 = vsub.s32 0, %v127
  %v129 = vrot.slane %v22, %v128
  %131 = vmatprep.subr.mxu0 0.0
  %132 = vmatpush1.msra.mxu0 %v124
  %133 = vmatprep.subr.mxu0 0.0
  %134 = vmatpush1.msra.mxu0 %v123
  %135 = vmatprep.subr.mxu0 0.0
  %136 = vmatpush1.msra.mxu0 %v122
  %137 = vmatprep.subr.mxu0 0.0
  %138 = vmatpush1.msra.mxu0 %v121
  %139 = vmatprep.subr.mxu0 0.0
  %140 = vmatpush1.msra.mxu0 %v120
  %141 = vmatprep.subr.mxu0 0.0
  %142 = vmatpush1.msra.mxu0 %v119
  %143 = vmatprep.subr.mxu0 0.0
  %144 = vmatpush1.msra.mxu0 %v118
  %145 = vmatprep.subr.mxu0 0.0
  %146 = vmatpush1.msra.mxu0 %v117
  %147 = vmatprep.subr.mxu0 0.0
  %148 = vmatpush1.msra.mxu0 %v116
  %149 = vmatprep.subr.mxu0 0.0
  %150 = vmatpush1.msra.mxu0 %v115
  %151 = vmatprep.subr.mxu0 0.0
  %152 = vmatpush1.msra.mxu0 %v114
  %153 = vmatprep.subr.mxu0 0.0
  %154 = vmatpush1.msra.mxu0 %v113
  %155 = vmatprep.subr.mxu0 0.0
  %156 = vmatpush1.msra.mxu0 %v112
  %157 = vmatprep.subr.mxu0 0.0
  %158 = vmatpush1.msra.mxu0 %v111
  %159 = vmatprep.subr.mxu0 0.0
  %160 = vmatpush1.msra.mxu0 %v110
  %161 = vmatprep.subr.mxu0 0.0
  %162 = vmatpush1.msra.mxu0 %v109
  %163 = vmatprep.subr.mxu0 0.0
  %164 = vmatpush2.msra.mxu0 0.0
  %165 = vmatprep.subr.mxu0 0.0
  %166 = vmatpush2.msra.mxu0 0.0
  %167 = vmatprep.subr.mxu0 0.0
  %168 = vmatpush2.msra.mxu0 0.0
  %169 = vmatprep.subr.mxu0 0.0
  %170 = vmatpush2.msra.mxu0 0.0
  %171 = vmatprep.subr.mxu0 0.0
  %172 = vmatpush2.msra.mxu0 0.0
  %173 = vmatprep.subr.mxu0 0.0
  %174 = vmatpush2.msra.mxu0 0.0
  %175 = vmatprep.subr.mxu0 0.0
  %176 = vmatpush2.msra.mxu0 0.0
  %177 = vmatprep.subr.mxu0 0.0
  %178 = vmatpush2.msra.mxu0 0.0
  %179 = vmatprep.subr.mxu0 0.0
  %180 = vmatpush2.msra.mxu0 0.0
  %181 = vmatprep.subr.mxu0 0.0
  %182 = vmatpush2.msra.mxu0 0.0
  %183 = vmatprep.subr.mxu0 0.0
  %184 = vmatpush2.msra.mxu0 0.0
  %185 = vmatprep.subr.mxu0 0.0
  %186 = vmatpush2.msra.mxu0 0.0
  %187 = vmatprep.subr.mxu0 0.0
  %188 = vmatpush2.msra.mxu0 0.0
  %189 = vmatprep.subr.mxu0 0.0
  %190 = vmatpush2.msra.mxu0 0.0
  %191 = vmatprep.subr.mxu0 0.0
  %192 = vmatpush2.msra.mxu0 0.0
  %193 = vmatprep.subr.mxu0 0.0
  %194 = vmatpush2.msra.mxu0 0.0
  %195 = vmatprep.mubr.f32.mxu0 0.0
  %196 = vmatmul.mubr.f32.gmra.mxu0 %v108
  %v197 = vpop.f32.mrf.mxu0
  %v198 = vadd.f32 %v129, %v197
  %v199 = vpop.f32.mrf.mxu0
  %200 = vdwg.mxu0
  %v201 = vmax.f32 %v198, 0.0
  %v202 = vld [vmem:[%s3] sm:$0xff]
  %v203 = vld [vmem:[%s3 + $0x8] sm:$0xff]
  %v204 = vld [vmem:[%s3 + $0x10] sm:$0xff]
  %v205 = vld [vmem:[%s3 + $0x18] sm:$0xff]
  %v206 = vld [vmem:[%s3 + $0x20] sm:$0xff]
  %v207 = vld [vmem:[%s3 + $0x28] sm:$0xff]
  %v208 = vld [vmem:[%s3 + $0x30] sm:$0xff]
  %v209 = vld [vmem:[%s3 + $0x38] sm:$0xff]
  %v210 = vld [vmem:[%s3 + $0x40] sm:$0xff]
  %v211 = vld [vmem:[%s3 + $0x48] sm:$0xff]
  %v212 = vld [vmem:[%s3 + $0x50] sm:$0xff]
  %v213 = vld [vmem:[%s3 + $0x58] sm:$0xff]
  %v214 = vld [vmem:[%s3 + $0x60] sm:$0xff]
  %v215 = vld [vmem:[%s3 + $0x68] sm:$0xff]
  %v216 = vld [vmem:[%s3 + $0x70] sm:$0xff]
  %v217 = vld [vmem:[%s3 + $0x78] sm:$0xff]
  %v219 = vlaneseq
  %v220 = vshrl.u32 %v219, 7
  %v221 = vsub.s32 0, %v220
  %v222 = vrot.slane %v23, %v221
  %224 = vmatprep.subr.mxu0 0.0
  %225 = vmatpush1.msra.mxu0 %v217
  %226 = vmatprep.subr.mxu0 0.0
  %227 = vmatpush1.msra.mxu0 %v216
  %228 = vmatprep.subr.mxu0 0.0
  %229 = vmatpush1.msra.mxu0 %v215
  %230 = vmatprep.subr.mxu0 0.0
  %231 = vmatpush1.msra.mxu0 %v214
  %232 = vmatprep.subr.mxu0 0.0
  %233 = vmatpush1.msra.mxu0 %v213
  %234 = vmatprep.subr.mxu0 0.0
  %235 = vmatpush1.msra.mxu0 %v212
  %236 = vmatprep.subr.mxu0 0.0
  %237 = vmatpush1.msra.mxu0 %v211
  %238 = vmatprep.subr.mxu0 0.0
  %239 = vmatpush1.msra.mxu0 %v210
  %240 = vmatprep.subr.mxu0 0.0
  %241 = vmatpush1.msra.mxu0 %v209
  %242 = vmatprep.subr.mxu0 0.0
  %243 = vmatpush1.msra.mxu0 %v208
  %244 = vmatprep.subr.mxu0 0.0
  %245 = vmatpush1.msra.mxu0 %v207
  %246 = vmatprep.subr.mxu0 0.0
  %247 = vmatpush1.msra.mxu0 %v206
  %248 = vmatprep.subr.mxu0 0.0
  %249 = vmatpush1.msra.mxu0 %v205
  %250 = vmatprep.subr.mxu0 0.0
  %251 = vmatpush1.msra.mxu0 %v204
  %252 = vmatprep.subr.mxu0 0.0
  %253 = vmatpush1.msra.mxu0 %v203
  %254 = vmatprep.subr.mxu0 0.0
  %255 = vmatpush1.msra.mxu0 %v202
  %256 = vmatprep.subr.mxu0 0.0
  %257 = vmatpush2.msra.mxu0 0.0
  %258 = vmatprep.subr.mxu0 0.0
  %259 = vmatpush2.msra.mxu0 0.0
  %260 = vmatprep.subr.mxu0 0.0
  %261 = vmatpush2.msra.mxu0 0.0
  %262 = vmatprep.subr.mxu0 0.0
  %263 = vmatpush2.msra.mxu0 0.0
  %264 = vmatprep.subr.mxu0 0.0
  %265 = vmatpush2.msra.mxu0 0.0
  %266 = vmatprep.subr.mxu0 0.0
  %267 = vmatpush2.msra.mxu0 0.0
  %268 = vmatprep.subr.mxu0 0.0
  %269 = vmatpush2.msra.mxu0 0.0
  %270 = vmatprep.subr.mxu0 0.0
  %271 = vmatpush2.msra.mxu0 0.0
  %272 = vmatprep.subr.mxu0 0.0
  %273 = vmatpush2.msra.mxu0 0.0
  %274 = vmatprep.subr.mxu0 0.0
  %275 = vmatpush2.msra.mxu0 0.0
  %276 = vmatprep.subr.mxu0 0.0
  %277 = vmatpush2.msra.mxu0 0.0
  %278 = vmatprep.subr.mxu0 0.0
  %279 = vmatpush2.msra.mxu0 0.0
  %280 = vmatprep.subr.mxu0 0.0
  %281 = vmatpush2.msra.mxu0 0.0
  %282 = vmatprep.subr.mxu0 0.0
  %283 = vmatpush2.msra.mxu0 0.0
  %284 = vmatprep.subr.mxu0 0.0
  %285 = vmatpush2.msra.mxu0 0.0
  %286 = vmatprep.subr.mxu0 0.0
  %287 = vmatpush2.msra.mxu0 0.0
  %288 = vmatprep.mubr.f32.mxu0 0.0
  %289 = vmatmul.mubr.f32.gmra.mxu0 %v201
  %v290 = vpop.f32.mrf.mxu0
  %v291 = vadd.f32 %v222, %v290
  %v292 = vpop.f32.mrf.mxu0
  %293 = vdwg.mxu0
  %294 = vst [vmem:[%s5] sm:$0xff] %v291
  // Predicated region
  $region22: #{classification_head.1} parent=0 // pred_check
    _
  $region23: #{classification_head.1} parent=0 // pred_check_branch
    %296 = sbr.rel (0) target = $region25
  $region24: #{classification_head.1} parent=0 // pred_region
    _
  $region25: #{classification_head.1} parent=0 // pred_fallthru
    _
  // Predicated region
  $region26: #{classification_head.1} parent=0 // pred_check
    _
  $region27: #{classification_head.1} parent=0 // pred_check_branch
    %298 = sbr.rel (0) target = $region29
  $region28: #{classification_head.1} parent=0 // pred_region
    _
  $region29: #{classification_head.1} parent=0 // pred_fallthru
    _

</llo_original>
